<compile_context>
chip_gen: v5e
topology: v5e:2x2
jax: 0.10.0
libtpu: 0.0.40
codegen_flags: <defaults>
</compile_context>

<pallas_src>
import functools

import jax
import jax.numpy as jnp
from jax.experimental import pallas as pl
from jax.experimental.pallas import tpu as pltpu


def _round_up(n, m):
    return ((n + m - 1) // m) * m


# ----------------------------- Pallas kernel --------------------------------
def _vae_kernel(
    x_ref, eps_ref,
    w_e0, b_e0, w_e1, b_e1,          # encoding layers (tanh)
    w_ml, b_ml,                      # fused mu|logvar head (packed, 2*dim lanes)
    w_d0, b_d0, w_d1, b_d1, w_d2, b_d2,   # decoding layers (last: no tanh)
    recon_ref, ml_ref,
    *, dim,
):
    f32 = jnp.float32
    bf16 = jnp.bfloat16

    # ---- encode: tanh(Linear) chain, bf16 MXU inputs, f32 accumulation ----
    x = x_ref[...].astype(bf16)
    h = jnp.tanh(jnp.dot(x, w_e0[...], preferred_element_type=f32) + b_e0[...])
    h = jnp.tanh(jnp.dot(h.astype(bf16), w_e1[...],
                         preferred_element_type=f32) + b_e1[...])

    # ---- fused mean/logvar head: one matmul, one (2*dim)-lane store ----
    ml = jnp.dot(h.astype(bf16), w_ml[...], preferred_element_type=f32) + b_ml[...]
    ml_ref[...] = ml

    # ---- reparametrize (f32): lanes [0:dim) = mu, [dim:2*dim) = logvar ----
    mu = ml[:, :dim]
    lv = ml[:, dim:2 * dim]
    z = eps_ref[...] * jnp.exp(0.5 * lv) + mu

    # ---- decode: tanh on all but last layer ----
    d = jnp.tanh(jnp.dot(z.astype(bf16), w_d0[...],
                         preferred_element_type=f32) + b_d0[...])
    d = jnp.tanh(jnp.dot(d.astype(bf16), w_d1[...],
                         preferred_element_type=f32) + b_d1[...])
    recon_ref[...] = jnp.dot(d.astype(bf16), w_d2[...],
                             preferred_element_type=f32) + b_d2[...]


# --------------------------- one-time weight prep ----------------------------
def prepare_params(params):
    """Cast weights to bf16 and fuse the mu/logvar head.  Called ONCE (outside
    the jitted forward) so the per-call forward does no weight copies."""
    bf16 = jnp.bfloat16
    f32 = jnp.float32
    p = params
    w_ml = jnp.concatenate([p["w_mu"], p["w_lv"]], axis=1).astype(bf16)
    b_ml = jnp.concatenate([p["b_mu"], p["b_lv"]], axis=1).astype(f32)
    weights = [
        p["w_e0"].astype(bf16), p["b_e0"].astype(f32),
        p["w_e1"].astype(bf16), p["b_e1"].astype(f32),
        w_ml, b_ml,
        p["w_d0"].astype(bf16), p["b_d0"].astype(f32),
        p["w_d1"].astype(bf16), p["b_d1"].astype(f32),
        p["w_d2"].astype(bf16), p["b_d2"].astype(f32),
    ]
    return [jax.device_put(w) for w in weights]


# ------------------------------ host wrapper ---------------------------------
def make_vae_forward(params, dim):
    """Returns a jitted forward(x, eps) -> (recon, mu, logvar)."""
    weights = prepare_params(params)          # hoisted, done once
    f32 = jnp.float32
    D = dim
    F0 = weights[0].shape[0]                  # input/recon feature width

    @jax.jit
    def forward(x, eps):
        B = x.shape[0]

        # batch tiling: multiple of 8 rows; >= 2 grid steps once B > 16 so the
        # "parallel" axis can shard across both TensorCores on v7x; TB capped
        # at 1024 to amortize per-step overhead while staying tiny in VMEM.
        if B <= 16:
            TB = _round_up(B, 8)
        else:
            TB = min(1024, _round_up(pl.cdiv(B, 2), 8))
        grid = (pl.cdiv(B, TB),)

        row_x = pl.BlockSpec((TB, F0), lambda i: (i, 0))
        row_eps = pl.BlockSpec((TB, D), lambda i: (i, 0))
        weight_specs = [pl.BlockSpec(w.shape, lambda i: (0, 0)) for w in weights]

        recon, ml = pl.pallas_call(
            functools.partial(_vae_kernel, dim=D),
            out_shape=(
                jax.ShapeDtypeStruct((B, F0), f32),       # recon (native width)
                jax.ShapeDtypeStruct((B, 2 * D), f32),    # packed mu|logvar
            ),
            grid=grid,
            in_specs=[row_x, row_eps] + weight_specs,
            out_specs=(
                pl.BlockSpec((TB, F0), lambda i: (i, 0)),
                pl.BlockSpec((TB, 2 * D), lambda i: (i, 0)),
            ),
            compiler_params=pltpu.CompilerParams(
                dimension_semantics=("parallel",),
                vmem_limit_bytes=32 * 1024 * 1024,
            ),
        )(x, eps, *weights)

        mu = ml[:, :D]
        logvar = ml[:, D:]
        return recon, mu, logvar

    return forward


# --------------------------- parameter construction -------------------------
def _orthogonal(key, in_dim, out_dim):
    # nn.init.orthogonal_ equivalent (deterministic, synthetic weights).
    return jax.nn.initializers.orthogonal()(key, (in_dim, out_dim), jnp.float32)


def make_vae_params(key, dim, size):
    """Mirrors VAE.__init__: encoding Linears over `size`, mean/std heads,
    decoding Linears in reverse. Biases are zero (constant_ init)."""
    keys = jax.random.split(key, 8)
    params = {}
    params["w_e0"] = _orthogonal(keys[0], size[0], size[1])
    params["b_e0"] = jnp.zeros((1, size[1]), jnp.float32)
    params["w_e1"] = _orthogonal(keys[1], size[1], size[2])
    params["b_e1"] = jnp.zeros((1, size[2]), jnp.float32)
    params["w_mu"] = _orthogonal(keys[2], size[2], dim)
    params["b_mu"] = jnp.zeros((1, dim), jnp.float32)
    params["w_lv"] = _orthogonal(keys[3], size[2], dim)
    params["b_lv"] = jnp.zeros((1, dim), jnp.float32)
    params["w_d0"] = _orthogonal(keys[4], dim, size[2])
    params["b_d0"] = jnp.zeros((1, size[2]), jnp.float32)
    params["w_d1"] = _orthogonal(keys[5], size[2], size[1])
    params["b_d1"] = jnp.zeros((1, size[1]), jnp.float32)
    params["w_d2"] = _orthogonal(keys[6], size[1], size[0])
    params["b_d2"] = jnp.zeros((1, size[0]), jnp.float32)
    return params


# ---------------------------- pure-JAX reference -----------------------------
def vae_reference(x, eps, p):
    """Matches the kernel's numerics: bf16 matmul inputs, f32 accumulation,
    f32 bias / tanh / exp."""
    bf16 = jnp.bfloat16
    f32 = jnp.float32

    def lin(a, w, b):
        return jnp.dot(a.astype(bf16), w.astype(bf16),
                       preferred_element_type=f32) + b

    h = jnp.tanh(lin(x, p["w_e0"], p["b_e0"]))
    h = jnp.tanh(lin(h, p["w_e1"], p["b_e1"]))
    mu = lin(h, p["w_mu"], p["b_mu"])
    logvar = lin(h, p["w_lv"], p["b_lv"])
    z = eps * jnp.exp(0.5 * logvar) + mu
    d = jnp.tanh(lin(z, p["w_d0"], p["b_d0"]))
    d = jnp.tanh(lin(d, p["w_d1"], p["b_d1"]))
    recon = lin(d, p["w_d2"], p["b_d2"])
    return recon, mu, logvar


if __name__ == "__main__":
    # Small shapes consistent with VAE(dim, size): size=(64, 128, 128), dim=32.
    SIZE = (64, 128, 128)
    DIM = 32
    BATCH = 16

    key = jax.random.PRNGKey(0)
    k_param, k_x, k_eps = jax.random.split(key, 3)

    params = make_vae_params(k_param, DIM, SIZE)
    x = jax.random.normal(k_x, (BATCH, SIZE[0]), jnp.float32)
    # TODO(synk): PyTorch draws the reparametrization noise inside forward();
    # here it is passed in deterministically so kernel and reference agree.
    eps = jax.random.normal(k_eps, (BATCH, DIM), jnp.float32)

    vae_forward = make_vae_forward(params, DIM)
    recon, mu, logvar = jax.block_until_ready(vae_forward(x, eps))

    recon_ref, mu_ref, logvar_ref = vae_reference(x, eps, params)
    assert jnp.allclose(recon, recon_ref, atol=5e-3, rtol=5e-3)
    assert jnp.allclose(mu, mu_ref, atol=5e-3, rtol=5e-3)
    assert jnp.allclose(logvar, logvar_ref, atol=5e-3, rtol=5e-3)

    print("KERNEL_OK")
</pallas_src>

<mosaic_0001>
module attributes {stable_mosaic.version = 11 : i64} {
  func.func @_vae_kernel(%arg0: i32, %arg1: memref<16x64xf32, #tpu.memory_space<vmem>>, %arg2: memref<16x32xf32, #tpu.memory_space<vmem>>, %arg3: memref<64x128xbf16, #tpu.memory_space<vmem>>, %arg4: memref<1x128xf32, #tpu.memory_space<vmem>>, %arg5: memref<128x128xbf16, #tpu.memory_space<vmem>>, %arg6: memref<1x128xf32, #tpu.memory_space<vmem>>, %arg7: memref<128x64xbf16, #tpu.memory_space<vmem>>, %arg8: memref<1x64xf32, #tpu.memory_space<vmem>>, %arg9: memref<32x128xbf16, #tpu.memory_space<vmem>>, %arg10: memref<1x128xf32, #tpu.memory_space<vmem>>, %arg11: memref<128x128xbf16, #tpu.memory_space<vmem>>, %arg12: memref<1x128xf32, #tpu.memory_space<vmem>>, %arg13: memref<128x64xbf16, #tpu.memory_space<vmem>>, %arg14: memref<1x64xf32, #tpu.memory_space<vmem>>, %arg15: memref<16x64xf32, #tpu.memory_space<vmem>>, %arg16: memref<16x64xf32, #tpu.memory_space<vmem>>) attributes {dimension_semantics = [#tpu.dimension_semantics<parallel>], iteration_bounds = array<i64: 1>, scalar_prefetch = 0 : i64, scratch_operands = 0 : i64, tpu.core_type = #tpu.core_type<tc>, window_params = [{transform_indices = @transform_0, window_bounds = array<i64: 16, 64>}, {transform_indices = @transform_1, window_bounds = array<i64: 16, 32>}, {pipeline_mode = #tpu.pipeline_mode<synchronous>, transform_indices = @transform_2, window_bounds = array<i64: 64, 128>}, {pipeline_mode = #tpu.pipeline_mode<synchronous>, transform_indices = @transform_3, window_bounds = array<i64: 1, 128>}, {pipeline_mode = #tpu.pipeline_mode<synchronous>, transform_indices = @transform_4, window_bounds = array<i64: 128, 128>}, {pipeline_mode = #tpu.pipeline_mode<synchronous>, transform_indices = @transform_5, window_bounds = array<i64: 1, 128>}, {pipeline_mode = #tpu.pipeline_mode<synchronous>, transform_indices = @transform_6, window_bounds = array<i64: 128, 64>}, {pipeline_mode = #tpu.pipeline_mode<synchronous>, transform_indices = @transform_7, window_bounds = array<i64: 1, 64>}, {pipeline_mode = #tpu.pipeline_mode<synchronous>, transform_indices = @transform_8, window_bounds = array<i64: 32, 128>}, {pipeline_mode = #tpu.pipeline_mode<synchronous>, transform_indices = @transform_9, window_bounds = array<i64: 1, 128>}, {pipeline_mode = #tpu.pipeline_mode<synchronous>, transform_indices = @transform_10, window_bounds = array<i64: 128, 128>}, {pipeline_mode = #tpu.pipeline_mode<synchronous>, transform_indices = @transform_11, window_bounds = array<i64: 1, 128>}, {pipeline_mode = #tpu.pipeline_mode<synchronous>, transform_indices = @transform_12, window_bounds = array<i64: 128, 64>}, {pipeline_mode = #tpu.pipeline_mode<synchronous>, transform_indices = @transform_13, window_bounds = array<i64: 1, 64>}, {transform_indices = @transform_14, window_bounds = array<i64: 16, 64>}, {transform_indices = @transform_15, window_bounds = array<i64: 16, 64>}]} {
    %c0 = arith.constant 0 : index
    %c0_0 = arith.constant 0 : index
    %0 = vector.load %arg1[%c0, %c0_0] : memref<16x64xf32, #tpu.memory_space<vmem>>, vector<16x64xf32>
    %1 = arith.truncf %0 : vector<16x64xf32> to vector<16x64xbf16>
    %c0_1 = arith.constant 0 : index
    %c0_2 = arith.constant 0 : index
    %2 = vector.load %arg3[%c0_1, %c0_2] : memref<64x128xbf16, #tpu.memory_space<vmem>>, vector<64x128xbf16>
    %cst = arith.constant dense<0.000000e+00> : vector<16x128xf32>
    %3 = tpu.matmul %1, %2, %cst {dimension_numbers = #tpu.dot_dimension_numbers<[1], [0], [0], [1], [0, 0, 1, 1], [], []>} : vector<16x64xbf16>, vector<64x128xbf16>, vector<16x128xf32> -> vector<16x128xf32>
    %c0_3 = arith.constant 0 : index
    %c0_4 = arith.constant 0 : index
    %4 = vector.load %arg4[%c0_3, %c0_4] : memref<1x128xf32, #tpu.memory_space<vmem>>, vector<1x128xf32>
    %5 = vector.broadcast %4 : vector<1x128xf32> to vector<16x128xf32>
    %6 = arith.addf %3, %5 : vector<16x128xf32>
    %7 = math.tanh %6 : vector<16x128xf32>
    %8 = arith.truncf %7 : vector<16x128xf32> to vector<16x128xbf16>
    %c0_5 = arith.constant 0 : index
    %c0_6 = arith.constant 0 : index
    %9 = vector.load %arg5[%c0_5, %c0_6] : memref<128x128xbf16, #tpu.memory_space<vmem>>, vector<128x128xbf16>
    %cst_7 = arith.constant dense<0.000000e+00> : vector<16x128xf32>
    %10 = tpu.matmul %8, %9, %cst_7 {dimension_numbers = #tpu.dot_dimension_numbers<[1], [0], [0], [1], [0, 0, 1, 1], [], []>} : vector<16x128xbf16>, vector<128x128xbf16>, vector<16x128xf32> -> vector<16x128xf32>
    %c0_8 = arith.constant 0 : index
    %c0_9 = arith.constant 0 : index
    %11 = vector.load %arg6[%c0_8, %c0_9] : memref<1x128xf32, #tpu.memory_space<vmem>>, vector<1x128xf32>
    %12 = vector.broadcast %11 : vector<1x128xf32> to vector<16x128xf32>
    %13 = arith.addf %10, %12 : vector<16x128xf32>
    %14 = math.tanh %13 : vector<16x128xf32>
    %15 = arith.truncf %14 : vector<16x128xf32> to vector<16x128xbf16>
    %c0_10 = arith.constant 0 : index
    %c0_11 = arith.constant 0 : index
    %16 = vector.load %arg7[%c0_10, %c0_11] : memref<128x64xbf16, #tpu.memory_space<vmem>>, vector<128x64xbf16>
    %cst_12 = arith.constant dense<0.000000e+00> : vector<16x64xf32>
    %17 = tpu.matmul %15, %16, %cst_12 {dimension_numbers = #tpu.dot_dimension_numbers<[1], [0], [0], [1], [0, 0, 1, 1], [], []>} : vector<16x128xbf16>, vector<128x64xbf16>, vector<16x64xf32> -> vector<16x64xf32>
    %c0_13 = arith.constant 0 : index
    %c0_14 = arith.constant 0 : index
    %18 = vector.load %arg8[%c0_13, %c0_14] : memref<1x64xf32, #tpu.memory_space<vmem>>, vector<1x64xf32>
    %19 = vector.broadcast %18 : vector<1x64xf32> to vector<16x64xf32>
    %20 = arith.addf %17, %19 : vector<16x64xf32>
    %c0_15 = arith.constant 0 : index
    %c0_16 = arith.constant 0 : index
    %21 = vector.load %arg16[%c0_15, %c0_16] : memref<16x64xf32, #tpu.memory_space<vmem>>, vector<16x64xf32>
    tpu.vector_store %arg16[%c0_15, %c0_16], %20 {strides = array<i32>} : memref<16x64xf32, #tpu.memory_space<vmem>>, vector<16x64xf32>,
    %22 = vector.extract_strided_slice %20 {offsets = [0, 0], sizes = [16, 32], strides = [1, 1]} : vector<16x64xf32> to vector<16x32xf32>
    %23 = vector.extract_strided_slice %20 {offsets = [0, 32], sizes = [16, 32], strides = [1, 1]} : vector<16x64xf32> to vector<16x32xf32>
    %c0_17 = arith.constant 0 : index
    %c0_18 = arith.constant 0 : index
    %24 = vector.load %arg2[%c0_17, %c0_18] : memref<16x32xf32, #tpu.memory_space<vmem>>, vector<16x32xf32>
    %cst_19 = arith.constant 5.000000e-01 : f32
    %25 = vector.broadcast %cst_19 : f32 to vector<16x32xf32>
    %26 = arith.mulf %25, %23 : vector<16x32xf32>
    %27 = math.exp %26 : vector<16x32xf32>
    %28 = arith.mulf %24, %27 : vector<16x32xf32>
    %29 = arith.addf %28, %22 : vector<16x32xf32>
    %30 = arith.truncf %29 : vector<16x32xf32> to vector<16x32xbf16>
    %c0_20 = arith.constant 0 : index
    %c0_21 = arith.constant 0 : index
    %31 = vector.load %arg9[%c0_20, %c0_21] : memref<32x128xbf16, #tpu.memory_space<vmem>>, vector<32x128xbf16>
    %cst_22 = arith.constant dense<0.000000e+00> : vector<16x128xf32>
    %32 = tpu.matmul %30, %31, %cst_22 {dimension_numbers = #tpu.dot_dimension_numbers<[1], [0], [0], [1], [0, 0, 1, 1], [], []>} : vector<16x32xbf16>, vector<32x128xbf16>, vector<16x128xf32> -> vector<16x128xf32>
    %c0_23 = arith.constant 0 : index
    %c0_24 = arith.constant 0 : index
    %33 = vector.load %arg10[%c0_23, %c0_24] : memref<1x128xf32, #tpu.memory_space<vmem>>, vector<1x128xf32>
    %34 = vector.broadcast %33 : vector<1x128xf32> to vector<16x128xf32>
    %35 = arith.addf %32, %34 : vector<16x128xf32>
    %36 = math.tanh %35 : vector<16x128xf32>
    %37 = arith.truncf %36 : vector<16x128xf32> to vector<16x128xbf16>
    %c0_25 = arith.constant 0 : index
    %c0_26 = arith.constant 0 : index
    %38 = vector.load %arg11[%c0_25, %c0_26] : memref<128x128xbf16, #tpu.memory_space<vmem>>, vector<128x128xbf16>
    %cst_27 = arith.constant dense<0.000000e+00> : vector<16x128xf32>
    %39 = tpu.matmul %37, %38, %cst_27 {dimension_numbers = #tpu.dot_dimension_numbers<[1], [0], [0], [1], [0, 0, 1, 1], [], []>} : vector<16x128xbf16>, vector<128x128xbf16>, vector<16x128xf32> -> vector<16x128xf32>
    %c0_28 = arith.constant 0 : index
    %c0_29 = arith.constant 0 : index
    %40 = vector.load %arg12[%c0_28, %c0_29] : memref<1x128xf32, #tpu.memory_space<vmem>>, vector<1x128xf32>
    %41 = vector.broadcast %40 : vector<1x128xf32> to vector<16x128xf32>
    %42 = arith.addf %39, %41 : vector<16x128xf32>
    %43 = math.tanh %42 : vector<16x128xf32>
    %44 = arith.truncf %43 : vector<16x128xf32> to vector<16x128xbf16>
    %c0_30 = arith.constant 0 : index
    %c0_31 = arith.constant 0 : index
    %45 = vector.load %arg13[%c0_30, %c0_31] : memref<128x64xbf16, #tpu.memory_space<vmem>>, vector<128x64xbf16>
    %cst_32 = arith.constant dense<0.000000e+00> : vector<16x64xf32>
    %46 = tpu.matmul %44, %45, %cst_32 {dimension_numbers = #tpu.dot_dimension_numbers<[1], [0], [0], [1], [0, 0, 1, 1], [], []>} : vector<16x128xbf16>, vector<128x64xbf16>, vector<16x64xf32> -> vector<16x64xf32>
    %c0_33 = arith.constant 0 : index
    %c0_34 = arith.constant 0 : index
    %47 = vector.load %arg14[%c0_33, %c0_34] : memref<1x64xf32, #tpu.memory_space<vmem>>, vector<1x64xf32>
    %48 = vector.broadcast %47 : vector<1x64xf32> to vector<16x64xf32>
    %49 = arith.addf %46, %48 : vector<16x64xf32>
    %c0_35 = arith.constant 0 : index
    %c0_36 = arith.constant 0 : index
    %50 = vector.load %arg15[%c0_35, %c0_36] : memref<16x64xf32, #tpu.memory_space<vmem>>, vector<16x64xf32>
    tpu.vector_store %arg15[%c0_35, %c0_36], %49 {strides = array<i32>} : memref<16x64xf32, #tpu.memory_space<vmem>>, vector<16x64xf32>,
    return
  }
  func.func @transform_0(%arg0: i32) -> (i32, i32) {
    %c0_i32 = arith.constant 0 : i32
    %c0_i32_0 = arith.constant 0 : i32
    return %arg0, %c0_i32 : i32, i32
  }
  func.func @transform_1(%arg0: i32) -> (i32, i32) {
    %c0_i32 = arith.constant 0 : i32
    %c0_i32_0 = arith.constant 0 : i32
    return %arg0, %c0_i32 : i32, i32
  }
  func.func @transform_2(%arg0: i32) -> (i32, i32) {
    %c0_i32 = arith.constant 0 : i32
    %c0_i32_0 = arith.constant 0 : i32
    %c0_i32_1 = arith.constant 0 : i32
    return %c0_i32, %c0_i32_0 : i32, i32
  }
  func.func @transform_3(%arg0: i32) -> (i32, i32) {
    %c0_i32 = arith.constant 0 : i32
    %c0_i32_0 = arith.constant 0 : i32
    %c0_i32_1 = arith.constant 0 : i32
    return %c0_i32, %c0_i32_0 : i32, i32
  }
  func.func @transform_4(%arg0: i32) -> (i32, i32) {
    %c0_i32 = arith.constant 0 : i32
    %c0_i32_0 = arith.constant 0 : i32
    %c0_i32_1 = arith.constant 0 : i32
    return %c0_i32, %c0_i32_0 : i32, i32
  }
  func.func @transform_5(%arg0: i32) -> (i32, i32) {
    %c0_i32 = arith.constant 0 : i32
    %c0_i32_0 = arith.constant 0 : i32
    %c0_i32_1 = arith.constant 0 : i32
    return %c0_i32, %c0_i32_0 : i32, i32
  }
  func.func @transform_6(%arg0: i32) -> (i32, i32) {
    %c0_i32 = arith.constant 0 : i32
    %c0_i32_0 = arith.constant 0 : i32
    %c0_i32_1 = arith.constant 0 : i32
    return %c0_i32, %c0_i32_0 : i32, i32
  }
  func.func @transform_7(%arg0: i32) -> (i32, i32) {
    %c0_i32 = arith.constant 0 : i32
    %c0_i32_0 = arith.constant 0 : i32
    %c0_i32_1 = arith.constant 0 : i32
    return %c0_i32, %c0_i32_0 : i32, i32
  }
  func.func @transform_8(%arg0: i32) -> (i32, i32) {
    %c0_i32 = arith.constant 0 : i32
    %c0_i32_0 = arith.constant 0 : i32
    %c0_i32_1 = arith.constant 0 : i32
    return %c0_i32, %c0_i32_0 : i32, i32
  }
  func.func @transform_9(%arg0: i32) -> (i32, i32) {
    %c0_i32 = arith.constant 0 : i32
    %c0_i32_0 = arith.constant 0 : i32
    %c0_i32_1 = arith.constant 0 : i32
    return %c0_i32, %c0_i32_0 : i32, i32
  }
  func.func @transform_10(%arg0: i32) -> (i32, i32) {
    %c0_i32 = arith.constant 0 : i32
    %c0_i32_0 = arith.constant 0 : i32
    %c0_i32_1 = arith.constant 0 : i32
    return %c0_i32, %c0_i32_0 : i32, i32
  }
  func.func @transform_11(%arg0: i32) -> (i32, i32) {
    %c0_i32 = arith.constant 0 : i32
    %c0_i32_0 = arith.constant 0 : i32
    %c0_i32_1 = arith.constant 0 : i32
    return %c0_i32, %c0_i32_0 : i32, i32
  }
  func.func @transform_12(%arg0: i32) -> (i32, i32) {
    %c0_i32 = arith.constant 0 : i32
    %c0_i32_0 = arith.constant 0 : i32
    %c0_i32_1 = arith.constant 0 : i32
    return %c0_i32, %c0_i32_0 : i32, i32
  }
  func.func @transform_13(%arg0: i32) -> (i32, i32) {
    %c0_i32 = arith.constant 0 : i32
    %c0_i32_0 = arith.constant 0 : i32
    %c0_i32_1 = arith.constant 0 : i32
    return %c0_i32, %c0_i32_0 : i32, i32
  }
  func.func @transform_14(%arg0: i32) -> (i32, i32) {
    %c0_i32 = arith.constant 0 : i32
    %c0_i32_0 = arith.constant 0 : i32
    return %arg0, %c0_i32 : i32, i32
  }
  func.func @transform_15(%arg0: i32) -> (i32, i32) {
    %c0_i32 = arith.constant 0 : i32
    %c0_i32_0 = arith.constant 0 : i32
    return %arg0, %c0_i32 : i32, i32
  }
}

</mosaic_0001>

<llo_original>
// kernel: forward.1
$region0: #{forward.1}
  #allocation0 [shape = 'u32[]', space=smem, size = 0x4, offset = 0x4, fixed_abs, tag = 'smem constant byte address 0x4 - core index']
  #allocation1 [shape = 'u32[72,128]{1,0:T(1,128)}', space=vmem, size = 0x9000, scoped, tag = 'internal scratch']
  %s0 = inlined_call_operand.hbm [shape: f32[16,64], index: 0, kind: input, shape index: {}]
  %s1 = inlined_call_operand.hbm [shape: f32[16,32], index: 1, kind: input, shape index: {}]
  %s2 = inlined_call_operand.hbm [shape: bf16[64,128], index: 2, kind: input, shape index: {}]
  %s3 = inlined_call_operand.vmem [shape: f32[1,128], index: 3, kind: input, shape index: {}, may-alias: {3,5,9,11}]
  %s4 = inlined_call_operand.hbm [shape: bf16[128,128], index: 4, kind: input, shape index: {}]
  %s5 = inlined_call_operand.vmem [shape: f32[1,128], index: 5, kind: input, shape index: {}, may-alias: {3,5,9,11}]
  %s6 = inlined_call_operand.hbm [shape: bf16[128,64], index: 6, kind: input, shape index: {}]
  %s7 = inlined_call_operand.vmem [shape: f32[1,64], index: 7, kind: input, shape index: {}, may-alias: {7,13}]
  %s8 = inlined_call_operand.hbm [shape: bf16[32,128], index: 8, kind: input, shape index: {}]
  %s9 = inlined_call_operand.vmem [shape: f32[1,128], index: 9, kind: input, shape index: {}, may-alias: {3,5,9,11}]
  %s10 = inlined_call_operand.hbm [shape: bf16[128,128], index: 10, kind: input, shape index: {}]
  %s11 = inlined_call_operand.vmem [shape: f32[1,128], index: 11, kind: input, shape index: {}, may-alias: {3,5,9,11}]
  %s12 = inlined_call_operand.hbm [shape: bf16[128,64], index: 12, kind: input, shape index: {}]
  %s13 = inlined_call_operand.vmem [shape: f32[1,64], index: 13, kind: input, shape index: {}, may-alias: {7,13}]
  %s14 = inlined_call_operand.hbm [shape: f32[16,64], index: 14, kind: output, shape index: {0}]
  %s15 = inlined_call_operand.vmem [shape: f32[16,64], index: 15, kind: output, shape index: {1}]
  %16 = xla_tuple %s14, %s15
  %s17 = sld [smem:[#allocation0]]
  $region106: #{forward.1} parent=0
    _
  %s19 = ssub.s32 1, %s17
  %s20 = scalar_select 0, %s19, %s17
  $region1: #{forward.1} parent=0
    #allocation2 [shape = 'u8[8192]{0}', space=vmem, size = 0x2000, scoped, tag = 'input window, operand 0, single buffered']
    #allocation3 [shape = 's32[1]{0}', space=sflag, size = 0x4, scoped, tag = 'scoped memory for forward.1']
    #allocation4 [shape = 's32[1]{0}', space=sflag, size = 0x4, scoped, tag = 'scoped memory for forward.1']
    #allocation5 [shape = 'u8[8192]{0}', space=vmem, size = 0x2000, scoped, tag = 'input window, operand 1, single buffered']
    #allocation6 [shape = 's32[1]{0}', space=sflag, size = 0x4, scoped, tag = 'scoped memory for forward.1']
    #allocation7 [shape = 'u8[16384]{0}', space=vmem, size = 0x4000, scoped, tag = 'input window, operand 2, single buffered']
    #allocation8 [shape = 'u8[32768]{0}', space=vmem, size = 0x8000, scoped, tag = 'input window, operand 4, single buffered']
    #allocation9 [shape = 's32[1]{0}', space=sflag, size = 0x4, scoped, tag = 'scoped memory for forward.1']
    #allocation10 [shape = 'u8[32768]{0}', space=vmem, size = 0x8000, scoped, tag = 'input window, operand 6, single buffered']
    #allocation11 [shape = 'u8[8192]{0}', space=vmem, size = 0x2000, scoped, tag = 'input window, operand 8, single buffered']
    #allocation12 [shape = 's32[1]{0}', space=sflag, size = 0x4, scoped, tag = 'scoped memory for forward.1']
    #allocation13 [shape = 'u8[32768]{0}', space=vmem, size = 0x8000, scoped, tag = 'input window, operand 10, single buffered']
    #allocation14 [shape = 'u8[32768]{0}', space=vmem, size = 0x8000, scoped, tag = 'input window, operand 12, single buffered']
    #allocation15 [shape = 's32[1]{0}', space=sflag, size = 0x4, scoped, tag = 'scoped memory for forward.1']
    #allocation16 [shape = 'u8[8192]{0}', space=vmem, size = 0x2000, scoped, tag = 'output window, operand 0, single buffered']
    %21 = vsyncpa [#allocation3], 0
    %22 = vsyncpa [#allocation6], 0
    %23 = vsyncpa [#allocation9], 0
    %24 = vsyncpa [#allocation12], 0
    %25 = vsyncpa [#allocation15], 0
    %26 = vsyncpa [#allocation4], 0
    // Predicated region
    $region2: #{forward.1} parent=1 // pred_check
      _
    $region3: #{forward.1} parent=1 // pred_check_branch
      %28 = sbr.rel (0) target = $region5
    $region4: #{forward.1} parent=1 // pred_region
      %30 = vsyncadd [#allocation3], 0
      %s31 = sshll.u32 %s0, 4
      %s32 = int_to_ptr.hbm [resolvable:$true] %s31
      %s33 = sshll.u32 [#allocation2], 4
      %s34 = int_to_ptr.vmem [resolvable:$true] %s33
      %39 = dma.hbm_to_vmem [thread:$0]  %s32, 256, %s34, [#allocation3], 128, 128, 8
    $region5: #{forward.1} parent=1 // pred_fallthru
      _
    // Predicated region
    $region6: #{forward.1} parent=1 // pred_check
      _
    $region7: #{forward.1} parent=1 // pred_check_branch
      %41 = sbr.rel (0) target = $region9
    $region8: #{forward.1} parent=1 // pred_region
      %43 = vsyncadd [#allocation6], 0
      %s44 = sshll.u32 %s1, 4
      %s45 = int_to_ptr.hbm [resolvable:$true] %s44
      %s46 = sshll.u32 [#allocation5], 4
      %s47 = int_to_ptr.vmem [resolvable:$true] %s46
      %52 = dma.hbm_to_vmem [thread:$0]  %s45, 256, %s47, [#allocation6], 128, 128, 8
    $region9: #{forward.1} parent=1 // pred_fallthru
      _
    // Predicated region
    $region10: #{forward.1} parent=1 // pred_check
      _
    $region11: #{forward.1} parent=1 // pred_check_branch
      %54 = sbr.rel (0) target = $region13
    $region12: #{forward.1} parent=1 // pred_region
      %56 = vsyncadd [#allocation6], 0
      %s57 = sshll.u32 %s2, 4
      %s58 = int_to_ptr.hbm [resolvable:$true] %s57
      %s59 = sshll.u32 [#allocation7], 4
      %s60 = int_to_ptr.vmem [resolvable:$true] %s59
      %65 = dma.hbm_to_vmem [thread:$0]  %s58, 512, %s60, [#allocation6], 64, 64, 4
    $region13: #{forward.1} parent=1 // pred_fallthru
      _
    // Predicated region
    $region14: #{forward.1} parent=1 // pred_check
      _
    $region15: #{forward.1} parent=1 // pred_check_branch
      %67 = sbr.rel (0) target = $region17
    $region16: #{forward.1} parent=1 // pred_region
      _
    $region17: #{forward.1} parent=1 // pred_fallthru
      _
    // Predicated region
    $region18: #{forward.1} parent=1 // pred_check
      _
    $region19: #{forward.1} parent=1 // pred_check_branch
      %69 = sbr.rel (0) target = $region21
    $region20: #{forward.1} parent=1 // pred_region
      %71 = vsyncadd [#allocation9], 0
      %s72 = sshll.u32 %s4, 4
      %s73 = int_to_ptr.hbm [resolvable:$true] %s72
      %s74 = sshll.u32 [#allocation8], 4
      %s75 = int_to_ptr.vmem [resolvable:$true] %s74
      %80 = dma.hbm_to_vmem [thread:$0]  %s73, 1024, %s75, [#allocation9], 64, 64, 4
    $region21: #{forward.1} parent=1 // pred_fallthru
      _
    // Predicated region
    $region22: #{forward.1} parent=1 // pred_check
      _
    $region23: #{forward.1} parent=1 // pred_check_branch
      %82 = sbr.rel (0) target = $region25
    $region24: #{forward.1} parent=1 // pred_region
      _
    $region25: #{forward.1} parent=1 // pred_fallthru
      _
    // Predicated region
    $region26: #{forward.1} parent=1 // pred_check
      _
    $region27: #{forward.1} parent=1 // pred_check_branch
      %84 = sbr.rel (0) target = $region29
    $region28: #{forward.1} parent=1 // pred_region
      %86 = vsyncadd [#allocation9], 0
      %s87 = sshll.u32 %s6, 4
      %s88 = int_to_ptr.hbm [resolvable:$true] %s87
      %s89 = sshll.u32 [#allocation10], 4
      %s90 = int_to_ptr.vmem [resolvable:$true] %s89
      %95 = dma.hbm_to_vmem [thread:$0]  %s88, 1024, %s90, [#allocation9], 64, 64, 4
    $region29: #{forward.1} parent=1 // pred_fallthru
      _
    // Predicated region
    $region30: #{forward.1} parent=1 // pred_check
      _
    $region31: #{forward.1} parent=1 // pred_check_branch
      %97 = sbr.rel (0) target = $region33
    $region32: #{forward.1} parent=1 // pred_region
      _
    $region33: #{forward.1} parent=1 // pred_fallthru
      _
    // Predicated region
    $region34: #{forward.1} parent=1 // pred_check
      _
    $region35: #{forward.1} parent=1 // pred_check_branch
      %99 = sbr.rel (0) target = $region37
    $region36: #{forward.1} parent=1 // pred_region
      %101 = vsyncadd [#allocation12], 0
      %s102 = sshll.u32 %s8, 4
      %s103 = int_to_ptr.hbm [resolvable:$true] %s102
      %s104 = sshll.u32 [#allocation11], 4
      %s105 = int_to_ptr.vmem [resolvable:$true] %s104
      %110 = dma.hbm_to_vmem [thread:$0]  %s103, 256, %s105, [#allocation12], 64, 64, 4
    $region37: #{forward.1} parent=1 // pred_fallthru
      _
    // Predicated region
    $region38: #{forward.1} parent=1 // pred_check
      _
    $region39: #{forward.1} parent=1 // pred_check_branch
      %112 = sbr.rel (0) target = $region41
    $region40: #{forward.1} parent=1 // pred_region
      _
    $region41: #{forward.1} parent=1 // pred_fallthru
      _
    // Predicated region
    $region42: #{forward.1} parent=1 // pred_check
      _
    $region43: #{forward.1} parent=1 // pred_check_branch
      %114 = sbr.rel (0) target = $region45
    $region44: #{forward.1} parent=1 // pred_region
      %116 = vsyncadd [#allocation12], 0
      %s117 = sshll.u32 %s10, 4
      %s118 = int_to_ptr.hbm [resolvable:$true] %s117
      %s119 = sshll.u32 [#allocation13], 4
      %s120 = int_to_ptr.vmem [resolvable:$true] %s119
      %125 = dma.hbm_to_vmem [thread:$0]  %s118, 1024, %s120, [#allocation12], 64, 64, 4
    $region45: #{forward.1} parent=1 // pred_fallthru
      _
    // Predicated region
    $region46: #{forward.1} parent=1 // pred_check
      _
    $region47: #{forward.1} parent=1 // pred_check_branch
      %127 = sbr.rel (0) target = $region49
    $region48: #{forward.1} parent=1 // pred_region
      _
    $region49: #{forward.1} parent=1 // pred_fallthru
      _
    // Predicated region
    $region50: #{forward.1} parent=1 // pred_check
      _
    $region51: #{forward.1} parent=1 // pred_check_branch
      %129 = sbr.rel (0) target = $region53
    $region52: #{forward.1} parent=1 // pred_region
      %131 = vsyncadd [#allocation15], 0
      %s132 = sshll.u32 %s12, 4
      %s133 = int_to_ptr.hbm [resolvable:$true] %s132
      %s134 = sshll.u32 [#allocation14], 4
      %s135 = int_to_ptr.vmem [resolvable:$true] %s134
      %140 = dma.hbm_to_vmem [thread:$0]  %s133, 1024, %s135, [#allocation15], 64, 64, 4
    $region53: #{forward.1} parent=1 // pred_fallthru
      _
    // Predicated region
    $region54: #{forward.1} parent=1 // pred_check
      _
    $region55: #{forward.1} parent=1 // pred_check_branch
      %142 = sbr.rel (0) target = $region57
    $region56: #{forward.1} parent=1 // pred_region
      _
    $region57: #{forward.1} parent=1 // pred_fallthru
      _
    // Predicated region
    $region58: #{forward.1} parent=1 // pred_check
      _
    $region59: #{forward.1} parent=1 // pred_check_branch
      %144 = sbr.rel (0) target = $region61
    $region60: #{forward.1} parent=1 // pred_region
      %146 = dma.done [#allocation3], 256
    $region61: #{forward.1} parent=1 // pred_fallthru
      _
    // Predicated region
    $region62: #{forward.1} parent=1 // pred_check
      _
    $region63: #{forward.1} parent=1 // pred_check_branch
      %148 = sbr.rel (0) target = $region65
    $region64: #{forward.1} parent=1 // pred_region
      %150 = dma.done [#allocation6], 256
    $region65: #{forward.1} parent=1 // pred_fallthru
      _
    // Predicated region
    $region66: #{forward.1} parent=1 // pred_check
      _
    $region67: #{forward.1} parent=1 // pred_check_branch
      %152 = sbr.rel (0) target = $region69
    $region68: #{forward.1} parent=1 // pred_region
      %154 = dma.done [#allocation6], 512
    $region69: #{forward.1} parent=1 // pred_fallthru
      _
    // Predicated region
    $region70: #{forward.1} parent=1 // pred_check
      _
    $region71: #{forward.1} parent=1 // pred_check_branch
      %156 = sbr.rel (0) target = $region73
    $region72: #{forward.1} parent=1 // pred_region
      %158 = dma.done [#allocation9], 1024
    $region73: #{forward.1} parent=1 // pred_fallthru
      _
    // Predicated region
    $region74: #{forward.1} parent=1 // pred_check
      _
    $region75: #{forward.1} parent=1 // pred_check_branch
      %160 = sbr.rel (0) target = $region77
    $region76: #{forward.1} parent=1 // pred_region
      %162 = dma.done [#allocation9], 1024
    $region77: #{forward.1} parent=1 // pred_fallthru
      _
    // Predicated region
    $region78: #{forward.1} parent=1 // pred_check
      _
    $region79: #{forward.1} parent=1 // pred_check_branch
      %164 = sbr.rel (0) target = $region81
    $region80: #{forward.1} parent=1 // pred_region
      %166 = dma.done [#allocation12], 256
    $region81: #{forward.1} parent=1 // pred_fallthru
      _
    // Predicated region
    $region82: #{forward.1} parent=1 // pred_check
      _
    $region83: #{forward.1} parent=1 // pred_check_branch
      %168 = sbr.rel (0) target = $region85
    $region84: #{forward.1} parent=1 // pred_region
      %170 = dma.done [#allocation12], 1024
    $region85: #{forward.1} parent=1 // pred_fallthru
      _
    // Predicated region
    $region86: #{forward.1} parent=1 // pred_check
      _
    $region87: #{forward.1} parent=1 // pred_check_branch
      %172 = sbr.rel (0) target = $region89
    $region88: #{forward.1} parent=1 // pred_region
      %174 = dma.done [#allocation15], 1024
    $region89: #{forward.1} parent=1 // pred_fallthru
      _
    %v176 = vld [vmem:[#allocation2] sm:$0xff]
    %v177 = vld [vmem:[#allocation2 + $0x8] sm:$0xff]
    %v178 = vpack.c.bf16 %v177, %v176
    %v179 = vld [vmem:[#allocation7] sm:$0xf]
    %v180 = vld [vmem:[#allocation7 + $0x4] sm:$0xf]
    %v181 = vld [vmem:[#allocation7 + $0x8] sm:$0xf]
    %v182 = vld [vmem:[#allocation7 + $0xc] sm:$0xf]
    %v183 = vld [vmem:[#allocation7 + $0x10] sm:$0xf]
    %v184 = vld [vmem:[#allocation7 + $0x14] sm:$0xf]
    %v185 = vld [vmem:[#allocation7 + $0x18] sm:$0xf]
    %v186 = vld [vmem:[#allocation7 + $0x1c] sm:$0xf]
    %v187 = vld [vmem:[%s3] sm:$0x1]
    %v189 = vperm.slane %v187, 0
    %v199 = vunpack.c.l.b16 %v179
    %v200 = vunpack.c.l.b16 %v180
    %v201 = vunpack.c.l.b16 %v181
    %v202 = vunpack.c.l.b16 %v182
    %v203 = vunpack.c.l.b16 %v183
    %v204 = vunpack.c.l.b16 %v184
    %v205 = vunpack.c.l.b16 %v185
    %v206 = vunpack.c.l.b16 %v186
    %v207 = vpack.c.b16 %v200, %v199
    %v208 = vpack.c.b16 %v202, %v201
    %v209 = vpack.c.b16 %v204, %v203
    %v210 = vpack.c.b16 %v206, %v205
    %vm215 = vcmask 523264
    %v217 = vsel %vm215, %v178, 0
    %219 = vmatpush.bf16.msra.mxu0 0
    %220 = vmatpush.bf16.msra.mxu0 0
    %221 = vmatpush.bf16.msra.mxu0 0
    %222 = vmatpush.bf16.msra.mxu0 0
    %223 = vmatpush.bf16.msra.mxu0 %v210
    %224 = vmatpush.bf16.msra.mxu0 %v209
    %225 = vmatpush.bf16.msra.mxu0 %v208
    %226 = vmatpush.bf16.msra.mxu0 %v207
    %227 = vmatmul.bf16.gmra.mxu0 %v217
    %v228 = vpop.f32.mrf.mxu0
    %v229 = vadd.f32 %v189, %v228
    %v230 = vpop.f32.mrf.mxu0
    %v231 = vadd.f32 %v189, %v230
    %232 = vdwg.mxu0
    %v233 = vtanh.pop %v229
    %v234 = vtanh.pop %v231
    %v235 = vpack.c.bf16 %v234, %v233
    %v236 = vld [vmem:[#allocation8] sm:$0xf]
    %v237 = vld [vmem:[#allocation8 + $0x4] sm:$0xf]
    %v238 = vld [vmem:[#allocation8 + $0x8] sm:$0xf]
    %v239 = vld [vmem:[#allocation8 + $0xc] sm:$0xf]
    %v240 = vld [vmem:[#allocation8 + $0x10] sm:$0xf]
    %v241 = vld [vmem:[#allocation8 + $0x14] sm:$0xf]
    %v242 = vld [vmem:[#allocation8 + $0x18] sm:$0xf]
    %v243 = vld [vmem:[#allocation8 + $0x1c] sm:$0xf]
    %v244 = vld [vmem:[#allocation8 + $0x20] sm:$0xf]
    %v245 = vld [vmem:[#allocation8 + $0x24] sm:$0xf]
    %v246 = vld [vmem:[#allocation8 + $0x28] sm:$0xf]
    %v247 = vld [vmem:[#allocation8 + $0x2c] sm:$0xf]
    %v248 = vld [vmem:[#allocation8 + $0x30] sm:$0xf]
    %v249 = vld [vmem:[#allocation8 + $0x34] sm:$0xf]
    %v250 = vld [vmem:[#allocation8 + $0x38] sm:$0xf]
    %v251 = vld [vmem:[#allocation8 + $0x3c] sm:$0xf]
    %v252 = vld [vmem:[%s5] sm:$0x1]
    %v254 = vperm.slane %v252, 0
    %v272 = vunpack.c.l.b16 %v236
    %v273 = vunpack.c.l.b16 %v237
    %v274 = vunpack.c.l.b16 %v238
    %v275 = vunpack.c.l.b16 %v239
    %v276 = vunpack.c.l.b16 %v240
    %v277 = vunpack.c.l.b16 %v241
    %v278 = vunpack.c.l.b16 %v242
    %v279 = vunpack.c.l.b16 %v243
    %v280 = vunpack.c.l.b16 %v244
    %v281 = vunpack.c.l.b16 %v245
    %v282 = vunpack.c.l.b16 %v246
    %v283 = vunpack.c.l.b16 %v247
    %v284 = vunpack.c.l.b16 %v248
    %v285 = vunpack.c.l.b16 %v249
    %v286 = vunpack.c.l.b16 %v250
    %v287 = vunpack.c.l.b16 %v251
    %v288 = vpack.c.b16 %v273, %v272
    %v289 = vpack.c.b16 %v275, %v274
    %v290 = vpack.c.b16 %v277, %v276
    %v291 = vpack.c.b16 %v279, %v278
    %v292 = vpack.c.b16 %v281, %v280
    %v293 = vpack.c.b16 %v283, %v282
    %v294 = vpack.c.b16 %v285, %v284
    %v295 = vpack.c.b16 %v287, %v286
    %304 = vmatpush.bf16.msra.mxu0 %v295
    %305 = vmatpush.bf16.msra.mxu0 %v294
    %306 = vmatpush.bf16.msra.mxu0 %v293
    %307 = vmatpush.bf16.msra.mxu0 %v292
    %308 = vmatpush.bf16.msra.mxu0 %v291
    %309 = vmatpush.bf16.msra.mxu0 %v290
    %310 = vmatpush.bf16.msra.mxu0 %v289
    %311 = vmatpush.bf16.msra.mxu0 %v288
    %312 = vmatmul.bf16.gmra.mxu0 %v235
    %v313 = vpop.f32.mrf.mxu0
    %v314 = vadd.f32 %v254, %v313
    %v315 = vpop.f32.mrf.mxu0
    %v316 = vadd.f32 %v254, %v315
    %317 = vdwg.mxu0
    %v318 = vtanh.pop %v314
    %v319 = vtanh.pop %v316
    %v320 = vpack.c.bf16 %v319, %v318
    %v321 = vld [vmem:[#allocation10] sm:$0xf]
    %v322 = vld [vmem:[#allocation10 + $0x4] sm:$0xf]
    %v323 = vld [vmem:[#allocation10 + $0x8] sm:$0xf]
    %v324 = vld [vmem:[#allocation10 + $0xc] sm:$0xf]
    %v325 = vld [vmem:[#allocation10 + $0x10] sm:$0xf]
    %v326 = vld [vmem:[#allocation10 + $0x14] sm:$0xf]
    %v327 = vld [vmem:[#allocation10 + $0x18] sm:$0xf]
    %v328 = vld [vmem:[#allocation10 + $0x1c] sm:$0xf]
    %v329 = vld [vmem:[#allocation10 + $0x20] sm:$0xf]
    %v330 = vld [vmem:[#allocation10 + $0x24] sm:$0xf]
    %v331 = vld [vmem:[#allocation10 + $0x28] sm:$0xf]
    %v332 = vld [vmem:[#allocation10 + $0x2c] sm:$0xf]
    %v333 = vld [vmem:[#allocation10 + $0x30] sm:$0xf]
    %v334 = vld [vmem:[#allocation10 + $0x34] sm:$0xf]
    %v335 = vld [vmem:[#allocation10 + $0x38] sm:$0xf]
    %v336 = vld [vmem:[#allocation10 + $0x3c] sm:$0xf]
    %v337 = vld [vmem:[%s7] sm:$0x1]
    %v339 = vperm.slane %v337, 0
    %v357 = vunpack.c.l.b16 %v321
    %v358 = vunpack.c.l.b16 %v322
    %v359 = vunpack.c.l.b16 %v323
    %v360 = vunpack.c.l.b16 %v324
    %v361 = vunpack.c.l.b16 %v325
    %v362 = vunpack.c.l.b16 %v326
    %v363 = vunpack.c.l.b16 %v327
    %v364 = vunpack.c.l.b16 %v328
    %v365 = vunpack.c.l.b16 %v329
    %v366 = vunpack.c.l.b16 %v330
    %v367 = vunpack.c.l.b16 %v331
    %v368 = vunpack.c.l.b16 %v332
    %v369 = vunpack.c.l.b16 %v333
    %v370 = vunpack.c.l.b16 %v334
    %v371 = vunpack.c.l.b16 %v335
    %v372 = vunpack.c.l.b16 %v336
    %v373 = vpack.c.b16 %v358, %v357
    %v374 = vpack.c.b16 %v360, %v359
    %v375 = vpack.c.b16 %v362, %v361
    %v376 = vpack.c.b16 %v364, %v363
    %v377 = vpack.c.b16 %v366, %v365
    %v378 = vpack.c.b16 %v368, %v367
    %v379 = vpack.c.b16 %v370, %v369
    %v380 = vpack.c.b16 %v372, %v371
    %389 = vmatpush.bf16.msra.mxu0 %v380
    %390 = vmatpush.bf16.msra.mxu0 %v379
    %391 = vmatpush.bf16.msra.mxu0 %v378
    %392 = vmatpush.bf16.msra.mxu0 %v377
    %393 = vmatpush.bf16.msra.mxu0 %v376
    %394 = vmatpush.bf16.msra.mxu0 %v375
    %395 = vmatpush.bf16.msra.mxu0 %v374
    %396 = vmatpush.bf16.msra.mxu0 %v373
    %397 = vmatmul.bf16.gmra.mxu0 %v320
    %v398 = vpop.f32.mrf.mxu0
    %v399 = vadd.f32 %v339, %v398
    %v400 = vpop.f32.mrf.mxu0
    %v401 = vadd.f32 %v339, %v400
    %402 = vdwg.mxu0
    %403 = vst.msk [vmem:[%s15] sm:$0xff] %vm215, %v399
    %404 = vst.msk [vmem:[%s15 + $0x8] sm:$0xff] %vm215, %v401
    %v405 = vld [vmem:[#allocation5] sm:$0xff]
    %v406 = vld [vmem:[#allocation5 + $0x8] sm:$0xff]
    %v407 = vmul.f32 %v399, 0.5
    %v408 = vmul.f32 %v401, 0.5
    %v409 = vmul.f32 %v407, 1.442695
    %v410 = vpow.pop %v409
    %v411 = vmul.f32 %v408, 1.442695
    %v412 = vpow.pop %v411
    %415 = vrot.lane.b32.xlu0 %v410, 96
    %v416 = vpop.permute.xlu0 %415
    %417 = vrot.lane.b32.xlu0 %v412, 96
    %v418 = vpop.permute.xlu0 %417
    %v421 = vmul.f32 %v405, %v416
    %v422 = vmul.f32 %v406, %v418
    %v423 = vadd.f32 %v421, %v399
    %v424 = vadd.f32 %v422, %v401
    %v425 = vpack.c.bf16 %v424, %v423
    %v426 = vld [vmem:[#allocation11] sm:$0xf]
    %v427 = vld [vmem:[#allocation11 + $0x4] sm:$0xf]
    %v428 = vld [vmem:[#allocation11 + $0x8] sm:$0xf]
    %v429 = vld [vmem:[#allocation11 + $0xc] sm:$0xf]
    %v430 = vld [vmem:[%s9] sm:$0x1]
    %v432 = vperm.slane %v430, 0
    %v438 = vunpack.c.l.b16 %v426
    %v439 = vunpack.c.l.b16 %v427
    %v440 = vunpack.c.l.b16 %v428
    %v441 = vunpack.c.l.b16 %v429
    %v442 = vpack.c.b16 %v439, %v438
    %v443 = vpack.c.b16 %v441, %v440
    %vm446 = vcmask 261120
    %v448 = vsel %vm446, %v425, 0
    %450 = vmatpush.bf16.msra.mxu0 0
    %451 = vmatpush.bf16.msra.mxu0 0
    %452 = vmatpush.bf16.msra.mxu0 0
    %453 = vmatpush.bf16.msra.mxu0 0
    %454 = vmatpush.bf16.msra.mxu0 0
    %455 = vmatpush.bf16.msra.mxu0 0
    %456 = vmatpush.bf16.msra.mxu0 %v443
    %457 = vmatpush.bf16.msra.mxu0 %v442
    %458 = vmatmul.bf16.gmra.mxu0 %v448
    %v459 = vpop.f32.mrf.mxu0
    %v460 = vadd.f32 %v432, %v459
    %v461 = vpop.f32.mrf.mxu0
    %v462 = vadd.f32 %v432, %v461
    %463 = vdwg.mxu0
    %v464 = vtanh.pop %v460
    %v465 = vtanh.pop %v462
    %v466 = vpack.c.bf16 %v465, %v464
    %v467 = vld [vmem:[#allocation13] sm:$0xf]
    %v468 = vld [vmem:[#allocation13 + $0x4] sm:$0xf]
    %v469 = vld [vmem:[#allocation13 + $0x8] sm:$0xf]
    %v470 = vld [vmem:[#allocation13 + $0xc] sm:$0xf]
    %v471 = vld [vmem:[#allocation13 + $0x10] sm:$0xf]
    %v472 = vld [vmem:[#allocation13 + $0x14] sm:$0xf]
    %v473 = vld [vmem:[#allocation13 + $0x18] sm:$0xf]
    %v474 = vld [vmem:[#allocation13 + $0x1c] sm:$0xf]
    %v475 = vld [vmem:[#allocation13 + $0x20] sm:$0xf]
    %v476 = vld [vmem:[#allocation13 + $0x24] sm:$0xf]
    %v477 = vld [vmem:[#allocation13 + $0x28] sm:$0xf]
    %v478 = vld [vmem:[#allocation13 + $0x2c] sm:$0xf]
    %v479 = vld [vmem:[#allocation13 + $0x30] sm:$0xf]
    %v480 = vld [vmem:[#allocation13 + $0x34] sm:$0xf]
    %v481 = vld [vmem:[#allocation13 + $0x38] sm:$0xf]
    %v482 = vld [vmem:[#allocation13 + $0x3c] sm:$0xf]
    %v483 = vld [vmem:[%s11] sm:$0x1]
    %v485 = vperm.slane %v483, 0
    %v503 = vunpack.c.l.b16 %v467
    %v504 = vunpack.c.l.b16 %v468
    %v505 = vunpack.c.l.b16 %v469
    %v506 = vunpack.c.l.b16 %v470
    %v507 = vunpack.c.l.b16 %v471
    %v508 = vunpack.c.l.b16 %v472
    %v509 = vunpack.c.l.b16 %v473
    %v510 = vunpack.c.l.b16 %v474
    %v511 = vunpack.c.l.b16 %v475
    %v512 = vunpack.c.l.b16 %v476
    %v513 = vunpack.c.l.b16 %v477
    %v514 = vunpack.c.l.b16 %v478
    %v515 = vunpack.c.l.b16 %v479
    %v516 = vunpack.c.l.b16 %v480
    %v517 = vunpack.c.l.b16 %v481
    %v518 = vunpack.c.l.b16 %v482
    %v519 = vpack.c.b16 %v504, %v503
    %v520 = vpack.c.b16 %v506, %v505
    %v521 = vpack.c.b16 %v508, %v507
    %v522 = vpack.c.b16 %v510, %v509
    %v523 = vpack.c.b16 %v512, %v511
    %v524 = vpack.c.b16 %v514, %v513
    %v525 = vpack.c.b16 %v516, %v515
    %v526 = vpack.c.b16 %v518, %v517
    %535 = vmatpush.bf16.msra.mxu0 %v526
    %536 = vmatpush.bf16.msra.mxu0 %v525
    %537 = vmatpush.bf16.msra.mxu0 %v524
    %538 = vmatpush.bf16.msra.mxu0 %v523
    %539 = vmatpush.bf16.msra.mxu0 %v522
    %540 = vmatpush.bf16.msra.mxu0 %v521
    %541 = vmatpush.bf16.msra.mxu0 %v520
    %542 = vmatpush.bf16.msra.mxu0 %v519
    %543 = vmatmul.bf16.gmra.mxu0 %v466
    %v544 = vpop.f32.mrf.mxu0
    %v545 = vadd.f32 %v485, %v544
    %v546 = vpop.f32.mrf.mxu0
    %v547 = vadd.f32 %v485, %v546
    %548 = vdwg.mxu0
    %v549 = vtanh.pop %v545
    %v550 = vtanh.pop %v547
    %v551 = vpack.c.bf16 %v550, %v549
    %v552 = vld [vmem:[#allocation14] sm:$0xf]
    %v553 = vld [vmem:[#allocation14 + $0x4] sm:$0xf]
    %v554 = vld [vmem:[#allocation14 + $0x8] sm:$0xf]
    %v555 = vld [vmem:[#allocation14 + $0xc] sm:$0xf]
    %v556 = vld [vmem:[#allocation14 + $0x10] sm:$0xf]
    %v557 = vld [vmem:[#allocation14 + $0x14] sm:$0xf]
    %v558 = vld [vmem:[#allocation14 + $0x18] sm:$0xf]
    %v559 = vld [vmem:[#allocation14 + $0x1c] sm:$0xf]
    %v560 = vld [vmem:[#allocation14 + $0x20] sm:$0xf]
    %v561 = vld [vmem:[#allocation14 + $0x24] sm:$0xf]
    %v562 = vld [vmem:[#allocation14 + $0x28] sm:$0xf]
    %v563 = vld [vmem:[#allocation14 + $0x2c] sm:$0xf]
    %v564 = vld [vmem:[#allocation14 + $0x30] sm:$0xf]
    %v565 = vld [vmem:[#allocation14 + $0x34] sm:$0xf]
    %v566 = vld [vmem:[#allocation14 + $0x38] sm:$0xf]
    %v567 = vld [vmem:[#allocation14 + $0x3c] sm:$0xf]
    %v568 = vld [vmem:[%s13] sm:$0x1]
    %v570 = vperm.slane %v568, 0
    %v588 = vunpack.c.l.b16 %v552
    %v589 = vunpack.c.l.b16 %v553
    %v590 = vunpack.c.l.b16 %v554
    %v591 = vunpack.c.l.b16 %v555
    %v592 = vunpack.c.l.b16 %v556
    %v593 = vunpack.c.l.b16 %v557
    %v594 = vunpack.c.l.b16 %v558
    %v595 = vunpack.c.l.b16 %v559
    %v596 = vunpack.c.l.b16 %v560
    %v597 = vunpack.c.l.b16 %v561
    %v598 = vunpack.c.l.b16 %v562
    %v599 = vunpack.c.l.b16 %v563
    %v600 = vunpack.c.l.b16 %v564
    %v601 = vunpack.c.l.b16 %v565
    %v602 = vunpack.c.l.b16 %v566
    %v603 = vunpack.c.l.b16 %v567
    %v604 = vpack.c.b16 %v589, %v588
    %v605 = vpack.c.b16 %v591, %v590
    %v606 = vpack.c.b16 %v593, %v592
    %v607 = vpack.c.b16 %v595, %v594
    %v608 = vpack.c.b16 %v597, %v596
    %v609 = vpack.c.b16 %v599, %v598
    %v610 = vpack.c.b16 %v601, %v600
    %v611 = vpack.c.b16 %v603, %v602
    %620 = vmatpush.bf16.msra.mxu0 %v611
    %621 = vmatpush.bf16.msra.mxu0 %v610
    %622 = vmatpush.bf16.msra.mxu0 %v609
    %623 = vmatpush.bf16.msra.mxu0 %v608
    %624 = vmatpush.bf16.msra.mxu0 %v607
    %625 = vmatpush.bf16.msra.mxu0 %v606
    %626 = vmatpush.bf16.msra.mxu0 %v605
    %627 = vmatpush.bf16.msra.mxu0 %v604
    %628 = vmatmul.bf16.gmra.mxu0 %v551
    %v629 = vpop.f32.mrf.mxu0
    %v630 = vadd.f32 %v570, %v629
    %v631 = vpop.f32.mrf.mxu0
    %v632 = vadd.f32 %v570, %v631
    %633 = vdwg.mxu0
    %634 = vst.msk [vmem:[#allocation16] sm:$0xff] %vm215, %v630
    %635 = vst.msk [vmem:[#allocation16 + $0x8] sm:$0xff] %vm215, %v632
    // Predicated region
    $region90: #{forward.1} parent=1 // pred_check
      _
    $region91: #{forward.1} parent=1 // pred_check_branch
      %637 = sbr.rel (0) target = $region93
    $region92: #{forward.1} parent=1 // pred_region
      %639 = vsyncadd [#allocation4], 0
      %s640 = sshll.u32 [#allocation16], 4
      %s641 = int_to_ptr.vmem [resolvable:$true] %s640
      %s642 = sshll.u32 %s14, 4
      %s643 = int_to_ptr.hbm [resolvable:$true] %s642
      %648 = dma.vmem_to_hbm [thread:$0]  %s641, 256, %s643, [#allocation4], 128, 128, 8
    $region93: #{forward.1} parent=1 // pred_fallthru
      _
    // Predicated region
    $region94: #{forward.1} parent=1 // pred_check
      _
    $region95: #{forward.1} parent=1 // pred_check_branch
      %650 = sbr.rel (0) target = $region97
    $region96: #{forward.1} parent=1 // pred_region
      _
    $region97: #{forward.1} parent=1 // pred_fallthru
      _
    // Predicated region
    $region98: #{forward.1} parent=1 // pred_check
      _
    $region99: #{forward.1} parent=1 // pred_check_branch
      %652 = sbr.rel (0) target = $region101
    $region100: #{forward.1} parent=1 // pred_region
      %654 = dma.done [#allocation4], 256
    $region101: #{forward.1} parent=1 // pred_fallthru
      _
    // Predicated region
    $region102: #{forward.1} parent=1 // pred_check
      _
    $region103: #{forward.1} parent=1 // pred_check_branch
      %656 = sbr.rel (0) target = $region105
    $region104: #{forward.1} parent=1 // pred_region
      _
    $region105: #{forward.1} parent=1 // pred_fallthru
      _
    %657 = vsyncpa [#allocation3], 1
    %658 = vsyncpa [#allocation6], 1
    %659 = vsyncpa [#allocation9], 1
    %660 = vsyncpa [#allocation12], 1
    %661 = vsyncpa [#allocation15], 1
    %662 = vsyncpa [#allocation4], 1

</llo_original>
